<compile_context>
chip_gen: v7x
topology: tpu7x:2x2x1
jax: 0.10.0
libtpu: 0.0.40
codegen_flags: <defaults>
</compile_context>

<pallas_src>
import jax
import jax.numpy as jnp
from jax import lax
from jax.experimental import pallas as pl
from jax.experimental.pallas import tpu as pltpu


def make_mha_kernel(emb_size: int, num_heads: int, q_tile: int):
    E = emb_size
    H = num_heads
    d = E // H
    TQ = q_tile

    def kernel(x_ref, wqkv_ref, bqkv_ref, wu_ref, bu_ref, o_ref,
               kv_ref, hout_ref):
        qi = pl.program_id(1)

        # ---- K/V cache: project once per batch element (first query tile) --
        @pl.when(qi == 0)
        def _():
            xs = x_ref[0]                                      # (T, E) bf16
            k = (jnp.dot(xs, wqkv_ref[:, E:2 * E],
                         preferred_element_type=jnp.float32)
                 + bqkv_ref[:, E:2 * E])                       # (T, E) f32
            kv_ref[:, 0:E] = k.astype(jnp.bfloat16)
            v = (jnp.dot(xs, wqkv_ref[:, 2 * E:3 * E],
                         preferred_element_type=jnp.float32)
                 + bqkv_ref[:, 2 * E:3 * E])                   # (T, E) f32
            kv_ref[:, E:2 * E] = v.astype(jnp.bfloat16)

        # ---- Q projection for this query tile (scale already folded in) ----
        q_start = pl.multiple_of(qi * TQ, TQ)
        xq = x_ref[0, pl.ds(q_start, TQ), :]                   # (TQ, E) bf16
        q = (jnp.dot(xq, wqkv_ref[:, 0:E],
                     preferred_element_type=jnp.float32)
             + bqkv_ref[:, 0:E]).astype(jnp.bfloat16)          # (TQ, E)

        # ---- Per-head attention; outputs land in their column range --------
        for h in range(H):                       # small static unroll over heads
            lo = h * d
            qh = q[:, lo:lo + d]                               # (TQ, d) bf16
            kh = kv_ref[:, lo:lo + d]                          # (T,  d) bf16
            vh = kv_ref[:, E + lo:E + lo + d]                  # (T,  d) bf16

            # energy = qh @ kh^T as a last-dim contraction (no K transpose).
            energy = lax.dot_general(
                qh, kh, (((1,), (1,)), ((), ())),
                preferred_element_type=jnp.float32)            # (TQ, T) f32

            # numerically-stable softmax in f32 (matches torch.softmax)
            energy = energy - jnp.max(energy, axis=-1, keepdims=True)
            p = jnp.exp(energy)
            attn = p * pl.reciprocal(jnp.sum(p, axis=-1, keepdims=True),
                                     approx=True)

            hout_ref[:, lo:lo + d] = jnp.dot(
                attn.astype(jnp.bfloat16), vh,
                preferred_element_type=jnp.float32).astype(jnp.bfloat16)

        # ---- unify_heads: one full-depth (TQ,E)@(E,E) MXU pass --------------
        out = (jnp.dot(hout_ref[...], wu_ref[...],
                       preferred_element_type=jnp.float32)
               + bu_ref[...])
        o_ref[0] = out.astype(o_ref.dtype)

    return kernel


def multi_head_attention(x, params, *, emb_size: int, num_heads: int,
                         q_tile: int | None = None, out_dtype=None):
    """x: (B, T, E) float32.  params: torch-layout weights (E,E) & biases (E,)."""
    B, T, E = x.shape
    assert E == emb_size
    H = num_heads
    assert E % H == 0
    if out_dtype is None:
        out_dtype = x.dtype   # pass jnp.bfloat16 if the consumer is bf16

    # Query-tile size: full T for short sequences, otherwise a bounded tile so
    # the (TQ, T) energy matrix and Q projection stay VMEM-safe (incl. v7x).
    if q_tile is None:
        q_tile = T if T <= 256 else 256
    assert T % q_tile == 0, "T must be divisible by the query tile size"
    n_q = T // q_tile

    scale = 1.0 / (E ** 0.5)  # transGAN/torch divides energy by sqrt(E)

    # Pre-transpose torch (out,in) weights to (in,out); fuse Q|K|V into one
    # slab; fold the softmax scale into the Q columns; bf16 matmul operands
    # (f32 accumulation in-kernel); biases stay f32.
    w_qkv = jnp.concatenate(
        [params["wq"].T * scale, params["wk"].T, params["wv"].T],
        axis=1).astype(jnp.bfloat16)                                # (E, 3E)
    b_qkv = jnp.concatenate(
        [params["bq"] * scale, params["bk"], params["bv"]]
    ).reshape(1, 3 * E).astype(jnp.float32)                         # (1, 3E)
    wu = params["wu"].T.astype(jnp.bfloat16)                        # (E, E)
    bu = params["bu"].reshape(1, E).astype(jnp.float32)             # (1, E)
    x_bf = x.astype(jnp.bfloat16)

    kernel = make_mha_kernel(E, H, q_tile)

    grid = (B, n_q)
    in_specs = [
        pl.BlockSpec((1, T, E),  lambda b, qi: (b, 0, 0)),   # x (full seq)
        pl.BlockSpec((E, 3 * E), lambda b, qi: (0, 0)),      # fused W_qkv
        pl.BlockSpec((1, 3 * E), lambda b, qi: (0, 0)),      # fused b_qkv
        pl.BlockSpec((E, E),     lambda b, qi: (0, 0)),      # W_unify
        pl.BlockSpec((1, E),     lambda b, qi: (0, 0)),      # b_unify
    ]
    out_specs = pl.BlockSpec((1, q_tile, E), lambda b, qi: (b, qi, 0))

    out_bytes = jnp.dtype(out_dtype).itemsize
    cost = pl.CostEstimate(
        flops=B * (8 * T * E * E + 4 * T * T * E),   # Q/K/V/unify + 2 attn matmuls
        transcendentals=B * H * T * T,               # exp in softmax
        bytes_accessed=(B * T * E * 2                # x read once (bf16)
                        + 4 * E * E * 2              # weights (bf16)
                        + 4 * E * 4                  # biases (f32)
                        + B * T * E * out_bytes),    # output
    )

    return pl.pallas_call(
        kernel,
        out_shape=jax.ShapeDtypeStruct((B, T, E), out_dtype),
        grid_spec=pltpu.PrefetchScalarGridSpec(
            num_scalar_prefetch=0,
            grid=grid,
            in_specs=in_specs,
            out_specs=out_specs,
            scratch_shapes=[
                pltpu.VMEM((T, 2 * E), jnp.bfloat16),    # cached K|V (per batch)
                pltpu.VMEM((q_tile, E), jnp.bfloat16),   # per-tile head outputs
            ],
        ),
        compiler_params=pltpu.CompilerParams(
            # batch "parallel" (megacore on v7x), query-tile axis "arbitrary"
            # so the per-batch K/V scratch is carried across tiles.
            dimension_semantics=("parallel", "arbitrary"),
            vmem_limit_bytes=48 * 1024 * 1024,
        ),
        cost_estimate=cost,
    )(x_bf, w_qkv, b_qkv, wu, bu)


def reference_mha(x, params, *, emb_size: int, num_heads: int):
    """Pure-JAX f32 reference reproducing the torch forward exactly."""
    B, T, E = x.shape
    h, d = num_heads, emb_size // num_heads

    def lin(x_, w, b_):
        return x_ @ w.T + b_

    keys = lin(x, params["wk"], params["bk"]).reshape(B, T, h, d).transpose(0, 2, 1, 3)
    queries = lin(x, params["wq"], params["bq"]).reshape(B, T, h, d).transpose(0, 2, 1, 3)
    values = lin(x, params["wv"], params["bv"]).reshape(B, T, h, d).transpose(0, 2, 1, 3)

    energy = jnp.einsum("bhqd,bhkd->bhqk", queries, keys)
    attention = jax.nn.softmax(energy / (E ** 0.5), axis=-1)
    out = jnp.einsum("bhqk,bhkd->bhqd", attention, values).transpose(0, 2, 1, 3).reshape(B, T, E)
    return lin(out, params["wu"], params["bu"])


if __name__ == "__main__":
    # Small shapes consistent with the module: batch=2, seq=8, emb=32, heads=4.
    B, T, E, H = 2, 8, 32, 4

    key = jax.random.PRNGKey(0)
    ks = jax.random.split(key, 9)
    x = jax.random.normal(ks[0], (B, T, E), dtype=jnp.float32)

    def init_linear(kw, kb, fan_in):
        bound = 1.0 / (fan_in ** 0.5)
        w = jax.random.uniform(kw, (E, E), jnp.float32, -bound, bound)  # torch (out, in)
        b = jax.random.uniform(kb, (E,), jnp.float32, -bound, bound)
        return w, b

    wq, bq = init_linear(ks[1], ks[2], E)
    wk, bk = init_linear(ks[3], ks[4], E)
    wv, bv = init_linear(ks[5], ks[6], E)
    wu, bu = init_linear(ks[7], ks[8], E)
    params = dict(wq=wq, bq=bq, wk=wk, bk=bk, wv=wv, bv=bv, wu=wu, bu=bu)

    out = multi_head_attention(x, params, emb_size=E, num_heads=H)
    out = jax.block_until_ready(out)

    ref = reference_mha(x, params, emb_size=E, num_heads=H)
    assert out.shape == (B, T, E)
    # Tolerance relaxed vs the f32 reference because matmul inputs are bf16
    # (accumulation stays in f32) and the softmax denom uses an approx recip.
    assert jnp.allclose(out, ref, atol=5e-2, rtol=5e-2), "mismatch vs reference"

    print("KERNEL_OK")
</pallas_src>

<mosaic_0001>
module attributes {stable_mosaic.version = 11 : i64} {
  func.func @kernel(%arg0: i32, %arg1: i32, %arg2: memref<1x8x32xbf16, #tpu.memory_space<vmem>>, %arg3: memref<32x96xbf16, #tpu.memory_space<vmem>>, %arg4: memref<1x96xf32, #tpu.memory_space<vmem>>, %arg5: memref<32x32xbf16, #tpu.memory_space<vmem>>, %arg6: memref<1x32xf32, #tpu.memory_space<vmem>>, %arg7: memref<1x8x32xf32, #tpu.memory_space<vmem>>, %arg8: memref<8x64xbf16, #tpu.memory_space<vmem>>, %arg9: memref<8x32xbf16, #tpu.memory_space<vmem>>) attributes {dimension_semantics = [#tpu.dimension_semantics<parallel>, #tpu.dimension_semantics<arbitrary>], iteration_bounds = array<i64: 2, 1>, scalar_prefetch = 0 : i64, scratch_operands = 2 : i64, tpu.core_type = #tpu.core_type<tc>, window_params = [{transform_indices = @transform_0, window_bounds = array<i64: 1, 8, 32>}, {pipeline_mode = #tpu.pipeline_mode<synchronous>, transform_indices = @transform_1, window_bounds = array<i64: 32, 96>}, {pipeline_mode = #tpu.pipeline_mode<synchronous>, transform_indices = @transform_2, window_bounds = array<i64: 1, 96>}, {pipeline_mode = #tpu.pipeline_mode<synchronous>, transform_indices = @transform_3, window_bounds = array<i64: 32, 32>}, {pipeline_mode = #tpu.pipeline_mode<synchronous>, transform_indices = @transform_4, window_bounds = array<i64: 1, 32>}, {transform_indices = @transform_5, window_bounds = array<i64: 1, 8, 32>}]} {
    %c0_i32 = arith.constant 0 : i32
    %0 = arith.cmpi eq, %arg1, %c0_i32 : i32
    %1 = arith.extui %0 : i1 to i32
    %c0_i32_0 = arith.constant 0 : i32
    %2 = arith.cmpi ne, %1, %c0_i32_0 : i32
    scf.if %2 {
      %c0_49 = arith.constant 0 : index
      %c0_50 = arith.constant 0 : index
      %c0_51 = arith.constant 0 : index
      %95 = vector.load %arg2[%c0_49, %c0_50, %c0_51] : memref<1x8x32xbf16, #tpu.memory_space<vmem>>, vector<1x8x32xbf16>
      %96 = vector.shape_cast %95 : vector<1x8x32xbf16> to vector<8x32xbf16>
      %c0_52 = arith.constant 0 : index
      %c32_53 = arith.constant 32 : index
      %97 = vector.load %arg3[%c0_52, %c32_53] : memref<32x96xbf16, #tpu.memory_space<vmem>>, vector<32x32xbf16>
      %cst_54 = arith.constant dense<0.000000e+00> : vector<8x32xf32>
      %98 = tpu.matmul %96, %97, %cst_54 {dimension_numbers = #tpu.dot_dimension_numbers<[1], [0], [0], [1], [0, 0, 1, 1], [], []>} : vector<8x32xbf16>, vector<32x32xbf16>, vector<8x32xf32> -> vector<8x32xf32>
      %c0_55 = arith.constant 0 : index
      %c32_56 = arith.constant 32 : index
      %99 = vector.load %arg4[%c0_55, %c32_56] : memref<1x96xf32, #tpu.memory_space<vmem>>, vector<1x32xf32>
      %100 = vector.broadcast %99 : vector<1x32xf32> to vector<8x32xf32>
      %101 = arith.addf %98, %100 : vector<8x32xf32>
      %102 = arith.truncf %101 : vector<8x32xf32> to vector<8x32xbf16>
      %c0_57 = arith.constant 0 : index
      %c0_58 = arith.constant 0 : index
      %103 = vector.load %arg8[%c0_57, %c0_58] : memref<8x64xbf16, #tpu.memory_space<vmem>>, vector<8x32xbf16>
      tpu.vector_store %arg8[%c0_57, %c0_58], %102 {strides = array<i32>} : memref<8x64xbf16, #tpu.memory_space<vmem>>, vector<8x32xbf16>,
      %c0_59 = arith.constant 0 : index
      %c64 = arith.constant 64 : index
      %104 = vector.load %arg3[%c0_59, %c64] : memref<32x96xbf16, #tpu.memory_space<vmem>>, vector<32x32xbf16>
      %cst_60 = arith.constant dense<0.000000e+00> : vector<8x32xf32>
      %105 = tpu.matmul %96, %104, %cst_60 {dimension_numbers = #tpu.dot_dimension_numbers<[1], [0], [0], [1], [0, 0, 1, 1], [], []>} : vector<8x32xbf16>, vector<32x32xbf16>, vector<8x32xf32> -> vector<8x32xf32>
      %c0_61 = arith.constant 0 : index
      %c64_62 = arith.constant 64 : index
      %106 = vector.load %arg4[%c0_61, %c64_62] : memref<1x96xf32, #tpu.memory_space<vmem>>, vector<1x32xf32>
      %107 = vector.broadcast %106 : vector<1x32xf32> to vector<8x32xf32>
      %108 = arith.addf %105, %107 : vector<8x32xf32>
      %109 = arith.truncf %108 : vector<8x32xf32> to vector<8x32xbf16>
      %c0_63 = arith.constant 0 : index
      %c32_64 = arith.constant 32 : index
      %110 = vector.load %arg8[%c0_63, %c32_64] : memref<8x64xbf16, #tpu.memory_space<vmem>>, vector<8x32xbf16>
      tpu.vector_store %arg8[%c0_63, %c32_64], %109 {strides = array<i32>} : memref<8x64xbf16, #tpu.memory_space<vmem>>, vector<8x32xbf16>,
    } else {
    }
    %c8_i32 = arith.constant 8 : i32
    %3 = arith.muli %arg1, %c8_i32 : i32
    %4 = tpu.assume_multiple %3, 8 : i32
    %c0 = arith.constant 0 : index
    %5 = arith.index_cast %4 : i32 to index
    %c0_1 = arith.constant 0 : index
    %6 = vector.load %arg2[%c0, %5, %c0_1] : memref<1x8x32xbf16, #tpu.memory_space<vmem>>, vector<1x8x32xbf16>
    %7 = vector.shape_cast %6 : vector<1x8x32xbf16> to vector<8x32xbf16>
    %c0_2 = arith.constant 0 : index
    %c0_3 = arith.constant 0 : index
    %8 = vector.load %arg3[%c0_2, %c0_3] : memref<32x96xbf16, #tpu.memory_space<vmem>>, vector<32x32xbf16>
    %cst = arith.constant dense<0.000000e+00> : vector<8x32xf32>
    %9 = tpu.matmul %7, %8, %cst {dimension_numbers = #tpu.dot_dimension_numbers<[1], [0], [0], [1], [0, 0, 1, 1], [], []>} : vector<8x32xbf16>, vector<32x32xbf16>, vector<8x32xf32> -> vector<8x32xf32>
    %c0_4 = arith.constant 0 : index
    %c0_5 = arith.constant 0 : index
    %10 = vector.load %arg4[%c0_4, %c0_5] : memref<1x96xf32, #tpu.memory_space<vmem>>, vector<1x32xf32>
    %11 = vector.broadcast %10 : vector<1x32xf32> to vector<8x32xf32>
    %12 = arith.addf %9, %11 : vector<8x32xf32>
    %13 = arith.truncf %12 : vector<8x32xf32> to vector<8x32xbf16>
    %14 = vector.extract_strided_slice %13 {offsets = [0, 0], sizes = [8, 8], strides = [1, 1]} : vector<8x32xbf16> to vector<8x8xbf16>
    %c0_6 = arith.constant 0 : index
    %c0_7 = arith.constant 0 : index
    %15 = vector.load %arg8[%c0_6, %c0_7] : memref<8x64xbf16, #tpu.memory_space<vmem>>, vector<8x8xbf16>
    %c0_8 = arith.constant 0 : index
    %c32 = arith.constant 32 : index
    %16 = vector.load %arg8[%c0_8, %c32] : memref<8x64xbf16, #tpu.memory_space<vmem>>, vector<8x8xbf16>
    %cst_9 = arith.constant dense<0.000000e+00> : vector<8x8xf32>
    %17 = tpu.matmul %14, %15, %cst_9 {dimension_numbers = #tpu.dot_dimension_numbers<[1], [1], [0], [0], [0, 0, 1, 0], [], []>} : vector<8x8xbf16>, vector<8x8xbf16>, vector<8x8xf32> -> vector<8x8xf32>
    %cst_10 = arith.constant dense<0xFF800000> : vector<8xf32>
    %18 = vector.multi_reduction <maximumf>, %17, %cst_10 [1] : vector<8x8xf32> to vector<8xf32>
    %19 = vector.shape_cast %18 : vector<8xf32> to vector<8x1xf32>
    %20 = vector.broadcast %19 : vector<8x1xf32> to vector<8x8xf32>
    %21 = arith.subf %17, %20 : vector<8x8xf32>
    %22 = math.exp %21 : vector<8x8xf32>
    %cst_11 = arith.constant dense<0.000000e+00> : vector<8xf32>
    %23 = vector.multi_reduction <add>, %22, %cst_11 [1] : vector<8x8xf32> to vector<8xf32>
    %24 = vector.shape_cast %23 : vector<8xf32> to vector<8x1xf32>
    %25 = tpu.reciprocal %24 {approx = true} : vector<8x1xf32> -> vector<8x1xf32>
    %26 = vector.broadcast %25 : vector<8x1xf32> to vector<8x8xf32>
    %27 = arith.mulf %22, %26 : vector<8x8xf32>
    %28 = arith.truncf %27 : vector<8x8xf32> to vector<8x8xbf16>
    %cst_12 = arith.constant dense<0.000000e+00> : vector<8x8xf32>
    %29 = tpu.matmul %28, %16, %cst_12 {dimension_numbers = #tpu.dot_dimension_numbers<[1], [0], [0], [1], [0, 0, 1, 1], [], []>} : vector<8x8xbf16>, vector<8x8xbf16>, vector<8x8xf32> -> vector<8x8xf32>
    %30 = arith.truncf %29 : vector<8x8xf32> to vector<8x8xbf16>
    %c0_13 = arith.constant 0 : index
    %c0_14 = arith.constant 0 : index
    %31 = vector.load %arg9[%c0_13, %c0_14] : memref<8x32xbf16, #tpu.memory_space<vmem>>, vector<8x8xbf16>
    tpu.vector_store %arg9[%c0_13, %c0_14], %30 {strides = array<i32>} : memref<8x32xbf16, #tpu.memory_space<vmem>>, vector<8x8xbf16>,
    %32 = vector.extract_strided_slice %13 {offsets = [0, 8], sizes = [8, 8], strides = [1, 1]} : vector<8x32xbf16> to vector<8x8xbf16>
    %c0_15 = arith.constant 0 : index
    %c8 = arith.constant 8 : index
    %33 = vector.load %arg8[%c0_15, %c8] : memref<8x64xbf16, #tpu.memory_space<vmem>>, vector<8x8xbf16>
    %c0_16 = arith.constant 0 : index
    %c40 = arith.constant 40 : index
    %34 = vector.load %arg8[%c0_16, %c40] : memref<8x64xbf16, #tpu.memory_space<vmem>>, vector<8x8xbf16>
    %cst_17 = arith.constant dense<0.000000e+00> : vector<8x8xf32>
    %35 = tpu.matmul %32, %33, %cst_17 {dimension_numbers = #tpu.dot_dimension_numbers<[1], [1], [0], [0], [0, 0, 1, 0], [], []>} : vector<8x8xbf16>, vector<8x8xbf16>, vector<8x8xf32> -> vector<8x8xf32>
    %cst_18 = arith.constant dense<0xFF800000> : vector<8xf32>
    %36 = vector.multi_reduction <maximumf>, %35, %cst_18 [1] : vector<8x8xf32> to vector<8xf32>
    %37 = vector.shape_cast %36 : vector<8xf32> to vector<8x1xf32>
    %38 = vector.broadcast %37 : vector<8x1xf32> to vector<8x8xf32>
    %39 = arith.subf %35, %38 : vector<8x8xf32>
    %40 = math.exp %39 : vector<8x8xf32>
    %cst_19 = arith.constant dense<0.000000e+00> : vector<8xf32>
    %41 = vector.multi_reduction <add>, %40, %cst_19 [1] : vector<8x8xf32> to vector<8xf32>
    %42 = vector.shape_cast %41 : vector<8xf32> to vector<8x1xf32>
    %43 = tpu.reciprocal %42 {approx = true} : vector<8x1xf32> -> vector<8x1xf32>
    %44 = vector.broadcast %43 : vector<8x1xf32> to vector<8x8xf32>
    %45 = arith.mulf %40, %44 : vector<8x8xf32>
    %46 = arith.truncf %45 : vector<8x8xf32> to vector<8x8xbf16>
    %cst_20 = arith.constant dense<0.000000e+00> : vector<8x8xf32>
    %47 = tpu.matmul %46, %34, %cst_20 {dimension_numbers = #tpu.dot_dimension_numbers<[1], [0], [0], [1], [0, 0, 1, 1], [], []>} : vector<8x8xbf16>, vector<8x8xbf16>, vector<8x8xf32> -> vector<8x8xf32>
    %48 = arith.truncf %47 : vector<8x8xf32> to vector<8x8xbf16>
    %c0_21 = arith.constant 0 : index
    %c8_22 = arith.constant 8 : index
    %49 = vector.load %arg9[%c0_21, %c8_22] : memref<8x32xbf16, #tpu.memory_space<vmem>>, vector<8x8xbf16>
    tpu.vector_store %arg9[%c0_21, %c8_22], %48 {strides = array<i32>} : memref<8x32xbf16, #tpu.memory_space<vmem>>, vector<8x8xbf16>,
    %50 = vector.extract_strided_slice %13 {offsets = [0, 16], sizes = [8, 8], strides = [1, 1]} : vector<8x32xbf16> to vector<8x8xbf16>
    %c0_23 = arith.constant 0 : index
    %c16 = arith.constant 16 : index
    %51 = vector.load %arg8[%c0_23, %c16] : memref<8x64xbf16, #tpu.memory_space<vmem>>, vector<8x8xbf16>
    %c0_24 = arith.constant 0 : index
    %c48 = arith.constant 48 : index
    %52 = vector.load %arg8[%c0_24, %c48] : memref<8x64xbf16, #tpu.memory_space<vmem>>, vector<8x8xbf16>
    %cst_25 = arith.constant dense<0.000000e+00> : vector<8x8xf32>
    %53 = tpu.matmul %50, %51, %cst_25 {dimension_numbers = #tpu.dot_dimension_numbers<[1], [1], [0], [0], [0, 0, 1, 0], [], []>} : vector<8x8xbf16>, vector<8x8xbf16>, vector<8x8xf32> -> vector<8x8xf32>
    %cst_26 = arith.constant dense<0xFF800000> : vector<8xf32>
    %54 = vector.multi_reduction <maximumf>, %53, %cst_26 [1] : vector<8x8xf32> to vector<8xf32>
    %55 = vector.shape_cast %54 : vector<8xf32> to vector<8x1xf32>
    %56 = vector.broadcast %55 : vector<8x1xf32> to vector<8x8xf32>
    %57 = arith.subf %53, %56 : vector<8x8xf32>
    %58 = math.exp %57 : vector<8x8xf32>
    %cst_27 = arith.constant dense<0.000000e+00> : vector<8xf32>
    %59 = vector.multi_reduction <add>, %58, %cst_27 [1] : vector<8x8xf32> to vector<8xf32>
    %60 = vector.shape_cast %59 : vector<8xf32> to vector<8x1xf32>
    %61 = tpu.reciprocal %60 {approx = true} : vector<8x1xf32> -> vector<8x1xf32>
    %62 = vector.broadcast %61 : vector<8x1xf32> to vector<8x8xf32>
    %63 = arith.mulf %58, %62 : vector<8x8xf32>
    %64 = arith.truncf %63 : vector<8x8xf32> to vector<8x8xbf16>
    %cst_28 = arith.constant dense<0.000000e+00> : vector<8x8xf32>
    %65 = tpu.matmul %64, %52, %cst_28 {dimension_numbers = #tpu.dot_dimension_numbers<[1], [0], [0], [1], [0, 0, 1, 1], [], []>} : vector<8x8xbf16>, vector<8x8xbf16>, vector<8x8xf32> -> vector<8x8xf32>
    %66 = arith.truncf %65 : vector<8x8xf32> to vector<8x8xbf16>
    %c0_29 = arith.constant 0 : index
    %c16_30 = arith.constant 16 : index
    %67 = vector.load %arg9[%c0_29, %c16_30] : memref<8x32xbf16, #tpu.memory_space<vmem>>, vector<8x8xbf16>
    tpu.vector_store %arg9[%c0_29, %c16_30], %66 {strides = array<i32>} : memref<8x32xbf16, #tpu.memory_space<vmem>>, vector<8x8xbf16>,
    %68 = vector.extract_strided_slice %13 {offsets = [0, 24], sizes = [8, 8], strides = [1, 1]} : vector<8x32xbf16> to vector<8x8xbf16>
    %c0_31 = arith.constant 0 : index
    %c24 = arith.constant 24 : index
    %69 = vector.load %arg8[%c0_31, %c24] : memref<8x64xbf16, #tpu.memory_space<vmem>>, vector<8x8xbf16>
    %c0_32 = arith.constant 0 : index
    %c56 = arith.constant 56 : index
    %70 = vector.load %arg8[%c0_32, %c56] : memref<8x64xbf16, #tpu.memory_space<vmem>>, vector<8x8xbf16>
    %cst_33 = arith.constant dense<0.000000e+00> : vector<8x8xf32>
    %71 = tpu.matmul %68, %69, %cst_33 {dimension_numbers = #tpu.dot_dimension_numbers<[1], [1], [0], [0], [0, 0, 1, 0], [], []>} : vector<8x8xbf16>, vector<8x8xbf16>, vector<8x8xf32> -> vector<8x8xf32>
    %cst_34 = arith.constant dense<0xFF800000> : vector<8xf32>
    %72 = vector.multi_reduction <maximumf>, %71, %cst_34 [1] : vector<8x8xf32> to vector<8xf32>
    %73 = vector.shape_cast %72 : vector<8xf32> to vector<8x1xf32>
    %74 = vector.broadcast %73 : vector<8x1xf32> to vector<8x8xf32>
    %75 = arith.subf %71, %74 : vector<8x8xf32>
    %76 = math.exp %75 : vector<8x8xf32>
    %cst_35 = arith.constant dense<0.000000e+00> : vector<8xf32>
    %77 = vector.multi_reduction <add>, %76, %cst_35 [1] : vector<8x8xf32> to vector<8xf32>
    %78 = vector.shape_cast %77 : vector<8xf32> to vector<8x1xf32>
    %79 = tpu.reciprocal %78 {approx = true} : vector<8x1xf32> -> vector<8x1xf32>
    %80 = vector.broadcast %79 : vector<8x1xf32> to vector<8x8xf32>
    %81 = arith.mulf %76, %80 : vector<8x8xf32>
    %82 = arith.truncf %81 : vector<8x8xf32> to vector<8x8xbf16>
    %cst_36 = arith.constant dense<0.000000e+00> : vector<8x8xf32>
    %83 = tpu.matmul %82, %70, %cst_36 {dimension_numbers = #tpu.dot_dimension_numbers<[1], [0], [0], [1], [0, 0, 1, 1], [], []>} : vector<8x8xbf16>, vector<8x8xbf16>, vector<8x8xf32> -> vector<8x8xf32>
    %84 = arith.truncf %83 : vector<8x8xf32> to vector<8x8xbf16>
    %c0_37 = arith.constant 0 : index
    %c24_38 = arith.constant 24 : index
    %85 = vector.load %arg9[%c0_37, %c24_38] : memref<8x32xbf16, #tpu.memory_space<vmem>>, vector<8x8xbf16>
    tpu.vector_store %arg9[%c0_37, %c24_38], %84 {strides = array<i32>} : memref<8x32xbf16, #tpu.memory_space<vmem>>, vector<8x8xbf16>,
    %c0_39 = arith.constant 0 : index
    %c0_40 = arith.constant 0 : index
    %86 = vector.load %arg9[%c0_39, %c0_40] : memref<8x32xbf16, #tpu.memory_space<vmem>>, vector<8x32xbf16>
    %c0_41 = arith.constant 0 : index
    %c0_42 = arith.constant 0 : index
    %87 = vector.load %arg5[%c0_41, %c0_42] : memref<32x32xbf16, #tpu.memory_space<vmem>>, vector<32x32xbf16>
    %cst_43 = arith.constant dense<0.000000e+00> : vector<8x32xf32>
    %88 = tpu.matmul %86, %87, %cst_43 {dimension_numbers = #tpu.dot_dimension_numbers<[1], [0], [0], [1], [0, 0, 1, 1], [], []>} : vector<8x32xbf16>, vector<32x32xbf16>, vector<8x32xf32> -> vector<8x32xf32>
    %c0_44 = arith.constant 0 : index
    %c0_45 = arith.constant 0 : index
    %89 = vector.load %arg6[%c0_44, %c0_45] : memref<1x32xf32, #tpu.memory_space<vmem>>, vector<1x32xf32>
    %90 = vector.broadcast %89 : vector<1x32xf32> to vector<8x32xf32>
    %91 = arith.addf %88, %90 : vector<8x32xf32>
    %c0_46 = arith.constant 0 : index
    %c0_47 = arith.constant 0 : index
    %c0_48 = arith.constant 0 : index
    %92 = vector.load %arg7[%c0_46, %c0_47, %c0_48] : memref<1x8x32xf32, #tpu.memory_space<vmem>>, vector<1x8x32xf32>
    %93 = vector.shape_cast %92 : vector<1x8x32xf32> to vector<8x32xf32>
    %94 = vector.shape_cast %91 : vector<8x32xf32> to vector<1x8x32xf32>
    tpu.vector_store %arg7[%c0_46, %c0_47, %c0_48], %94 {strides = array<i32>} : memref<1x8x32xf32, #tpu.memory_space<vmem>>, vector<1x8x32xf32>,
    return
  }
  func.func @transform_0(%arg0: i32, %arg1: i32) -> (i32, i32, i32) {
    %c0_i32 = arith.constant 0 : i32
    %c0_i32_0 = arith.constant 0 : i32
    %c0_i32_1 = arith.constant 0 : i32
    return %arg0, %c0_i32, %c0_i32_0 : i32, i32, i32
  }
  func.func @transform_1(%arg0: i32, %arg1: i32) -> (i32, i32) {
    %c0_i32 = arith.constant 0 : i32
    %c0_i32_0 = arith.constant 0 : i32
    %c0_i32_1 = arith.constant 0 : i32
    return %c0_i32, %c0_i32_0 : i32, i32
  }
  func.func @transform_2(%arg0: i32, %arg1: i32) -> (i32, i32) {
    %c0_i32 = arith.constant 0 : i32
    %c0_i32_0 = arith.constant 0 : i32
    %c0_i32_1 = arith.constant 0 : i32
    return %c0_i32, %c0_i32_0 : i32, i32
  }
  func.func @transform_3(%arg0: i32, %arg1: i32) -> (i32, i32) {
    %c0_i32 = arith.constant 0 : i32
    %c0_i32_0 = arith.constant 0 : i32
    %c0_i32_1 = arith.constant 0 : i32
    return %c0_i32, %c0_i32_0 : i32, i32
  }
  func.func @transform_4(%arg0: i32, %arg1: i32) -> (i32, i32) {
    %c0_i32 = arith.constant 0 : i32
    %c0_i32_0 = arith.constant 0 : i32
    %c0_i32_1 = arith.constant 0 : i32
    return %c0_i32, %c0_i32_0 : i32, i32
  }
  func.func @transform_5(%arg0: i32, %arg1: i32) -> (i32, i32, i32) {
    %c0_i32 = arith.constant 0 : i32
    %c0_i32_0 = arith.constant 0 : i32
    return %arg0, %arg1, %c0_i32 : i32, i32, i32
  }
}

</mosaic_0001>

<llo_original>
// kernel: tpu_custom_call.1
$region0: #{tpu_custom_call.1}
  #allocation0 [shape = 'u32[]', space=smem, size = 0x4, offset = 0x4, fixed_abs, tag = 'smem constant byte address 0x4 - core index']
  #allocation1 [shape = 'u32[144,128]{1,0:T(1,128)}', space=vmem, size = 0x12000, scoped, tag = 'internal scratch']
  #allocation2 [shape = 'bf16[8,64]{1,0:T(8,128)(2,1)}', space=vmem, size = 0x800, scoped, tag = 'scratch operand']
  #allocation3 [shape = 'bf16[8,32]{1,0:T(8,128)(2,1)}', space=vmem, size = 0x800, scoped, tag = 'scratch operand']
  %s0 = inlined_call_operand.hbm [shape: bf16[2,8,32], index: 0, kind: input, shape index: {}]
  %s1 = inlined_call_operand.hbm [shape: bf16[32,96], index: 1, kind: input, shape index: {}]
  %s2 = inlined_call_operand.vmem [shape: f32[1,96], index: 2, kind: input, shape index: {}]
  %s3 = inlined_call_operand.hbm [shape: bf16[32,32], index: 3, kind: input, shape index: {}]
  %s4 = inlined_call_operand.vmem [shape: f32[1,32], index: 4, kind: input, shape index: {}]
  %s5 = inlined_call_operand.hbm [shape: f32[2,8,32], index: 5, kind: output, shape index: {}]
  %s6 = sld [smem:[#allocation0]]
  $region69: #{tpu_custom_call.1} parent=0
    _
  %s8 = ssub.s32 1, %s6
  %s9 = scalar_select 0, %s8, %s6
  $region1: #{tpu_custom_call.1} parent=0
    #allocation4 [shape = 'u8[4096]{0}', space=vmem, size = 0x1000, scoped, tag = 'input window, operand 0']
    #allocation5 [shape = 's32[2]{0}', space=sflag, size = 0x8, scoped, tag = 'scoped memory for tpu_custom_call.1']
    #allocation6 [shape = 's32[2]{0}', space=sflag, size = 0x8, scoped, tag = 'scoped memory for tpu_custom_call.1']
    #allocation7 [shape = 'u8[8192]{0}', space=vmem, size = 0x2000, scoped, tag = 'input window, operand 1, single buffered']
    #allocation8 [shape = 's32[1]{0}', space=sflag, size = 0x4, scoped, tag = 'scoped memory for tpu_custom_call.1']
    #allocation9 [shape = 'u8[8192]{0}', space=vmem, size = 0x2000, scoped, tag = 'input window, operand 3, single buffered']
    #allocation10 [shape = 'u8[8192]{0}', space=vmem, size = 0x2000, scoped, tag = 'output window, operand 0']
    %10 = vsyncpa [#allocation5], 0
    %s11 = scalar_lea.sflag [#allocation5], 1
    %12 = vsyncpa %s11, 0
    %13 = vsyncpa [#allocation8], 0
    %14 = vsyncpa [#allocation6], 0
    %s15 = scalar_lea.sflag [#allocation6], 1
    %16 = vsyncpa %s15, 0
    loop: start=0, step=1, limit=4
    $region2: #{tpu_custom_call.1} parent=1 // loop_pre_header
      _
    $region3: #{tpu_custom_call.1} parent=1 // loop_header
      %s18 = sphi 0, %s22
      %p19 = scmp.ge.s32.totalorder %s18, 4
      %s25 = sphi 0, %s37
      %s26 = sphi 0, %s33
      %s27 = sphi 0, %s25
      %s28 = sphi 0, %s26
      %s29 = sphi 0, %s27
      %s30 = sphi 0, %s28
      %s40 = sphi 0, %s42
      %s43 = sphi 0, %s40
      %s44 = sphi 0, %s43
      %s60 = sphi 0, %s44
      %s64 = sphi 0, %s64
      %s66 = sphi 0, %s64
      %s67 = sphi 0, %s66
      %s81 = sphi 0, %s67
      %s85 = sphi 0, %s85
      %s87 = sphi 0, %s85
      %s88 = sphi 0, %s87
      %s102 = sphi 0, %s88
      %s106 = sphi 0, %s106
      %s108 = sphi 0, %s106
      %s109 = sphi 0, %s108
      %s123 = sphi 0, %s109
      %s127 = sphi 0, %s127
      %s129 = sphi 0, %s127
      %s130 = sphi 0, %s129
      %s144 = sphi 0, %s130
      %s152 = sphi 0, %s154
      %s155 = sphi 0, %s152
      %s156 = sphi 0, %s155
      %s172 = sphi 0, %s156
    $region4: #{tpu_custom_call.1} parent=1 // loop_header_branch
      %21 = sbr.rel (%p19) target = $region8
    $region5: #{tpu_custom_call.1} parent=1 // loop_body
      %s23 = ssub.s32 %s18, 1
      %s24 = ssub.s32 %s18, 2
      %s31 = sadd.s32 1, %s26
      %p32 = scmp.ge.s32.totalorder %s31, 1
      %s33 = scalar_select %p32, 0, %s31
      %s34 = sadd.s32 1, %s25
      %s35 = scalar_select %p32, %s34, %s25
      %p36 = scmp.ge.s32.totalorder %s35, 2
      %s37 = scalar_select %p36, 0, %s35
      %s38 = ssub.s32 %s25, %s37
      %p39 = scmp.eq.s32.totalorder %s38, 0
      %s41 = sadd.s32 %s40, 1
      %s42 = scalar_select %p39, %s40, %s41
      %p45 = pneg %p39
      %p46 = scmp.eq.s32.totalorder %s18, 1
      %p47 = por %p45, %p46
      %p48 = scmp.ne.s32.totalorder %s40, %s43
      %p49 = scmp.eq.s32.totalorder %s18, 0
      %p50 = por %p48, %p49
      %p51 = scmp.ne.s32.totalorder %s40, %s43
      %p52 = scmp.eq.s32.totalorder %s23, 1
      %p53 = por %p51, %p52
      %p54 = scmp.ne.s32.totalorder %s43, %s44
      %p55 = scmp.eq.s32.totalorder %s23, 0
      %p56 = por %p54, %p55
      %p57 = scmp.ne.s32.totalorder %s43, %s44
      %p58 = scmp.eq.s32.totalorder %s24, 1
      %p59 = por %p57, %p58
      %p61 = scmp.ne.s32.totalorder %s44, %s60
      %p62 = scmp.eq.s32.totalorder %s24, 0
      %p63 = por %p61, %p62
      %s65 = sadd.s32 %s64, 1
      %p68 = scmp.eq.s32.totalorder %s18, 1
      %p69 = scmp.ne.s32.totalorder %s64, %s66
      %p70 = scmp.eq.s32.totalorder %s18, 0
      %p71 = por %p69, %p70
      %p72 = scmp.ne.s32.totalorder %s64, %s66
      %p73 = scmp.eq.s32.totalorder %s23, 1
      %p74 = por %p72, %p73
      %p75 = scmp.ne.s32.totalorder %s66, %s67
      %p76 = scmp.eq.s32.totalorder %s23, 0
      %p77 = por %p75, %p76
      %p78 = scmp.ne.s32.totalorder %s66, %s67
      %p79 = scmp.eq.s32.totalorder %s24, 1
      %p80 = por %p78, %p79
      %p82 = scmp.ne.s32.totalorder %s67, %s81
      %p83 = scmp.eq.s32.totalorder %s24, 0
      %p84 = por %p82, %p83
      %s86 = sadd.s32 %s85, 1
      %p89 = scmp.eq.s32.totalorder %s18, 1
      %p90 = scmp.ne.s32.totalorder %s85, %s87
      %p91 = scmp.eq.s32.totalorder %s18, 0
      %p92 = por %p90, %p91
      %p93 = scmp.ne.s32.totalorder %s85, %s87
      %p94 = scmp.eq.s32.totalorder %s23, 1
      %p95 = por %p93, %p94
      %p96 = scmp.ne.s32.totalorder %s87, %s88
      %p97 = scmp.eq.s32.totalorder %s23, 0
      %p98 = por %p96, %p97
      %p99 = scmp.ne.s32.totalorder %s87, %s88
      %p100 = scmp.eq.s32.totalorder %s24, 1
      %p101 = por %p99, %p100
      %p103 = scmp.ne.s32.totalorder %s88, %s102
      %p104 = scmp.eq.s32.totalorder %s24, 0
      %p105 = por %p103, %p104
      %s107 = sadd.s32 %s106, 1
      %p110 = scmp.eq.s32.totalorder %s18, 1
      %p111 = scmp.ne.s32.totalorder %s106, %s108
      %p112 = scmp.eq.s32.totalorder %s18, 0
      %p113 = por %p111, %p112
      %p114 = scmp.ne.s32.totalorder %s106, %s108
      %p115 = scmp.eq.s32.totalorder %s23, 1
      %p116 = por %p114, %p115
      %p117 = scmp.ne.s32.totalorder %s108, %s109
      %p118 = scmp.eq.s32.totalorder %s23, 0
      %p119 = por %p117, %p118
      %p120 = scmp.ne.s32.totalorder %s108, %s109
      %p121 = scmp.eq.s32.totalorder %s24, 1
      %p122 = por %p120, %p121
      %p124 = scmp.ne.s32.totalorder %s109, %s123
      %p125 = scmp.eq.s32.totalorder %s24, 0
      %p126 = por %p124, %p125
      %s128 = sadd.s32 %s127, 1
      %p131 = scmp.eq.s32.totalorder %s18, 1
      %p132 = scmp.ne.s32.totalorder %s127, %s129
      %p133 = scmp.eq.s32.totalorder %s18, 0
      %p134 = por %p132, %p133
      %p135 = scmp.ne.s32.totalorder %s127, %s129
      %p136 = scmp.eq.s32.totalorder %s23, 1
      %p137 = por %p135, %p136
      %p138 = scmp.ne.s32.totalorder %s129, %s130
      %p139 = scmp.eq.s32.totalorder %s23, 0
      %p140 = por %p138, %p139
      %p141 = scmp.ne.s32.totalorder %s129, %s130
      %p142 = scmp.eq.s32.totalorder %s24, 1
      %p143 = por %p141, %p142
      %p145 = scmp.ne.s32.totalorder %s130, %s144
      %p146 = scmp.eq.s32.totalorder %s24, 0
      %p147 = por %p145, %p146
      %s148 = ssub.s32 %s25, %s37
      %s149 = ssub.s32 %s26, %s33
      %s150 = sor.u32 %s148, %s149
      %p151 = scmp.eq.s32.totalorder %s150, 0
      %s153 = sadd.s32 %s152, 1
      %s154 = scalar_select %p151, %s152, %s153
      %p157 = pneg %p151
      %p158 = scmp.eq.s32.totalorder %s18, 1
      %p159 = por %p157, %p158
      %p160 = scmp.ne.s32.totalorder %s152, %s155
      %p161 = scmp.eq.s32.totalorder %s18, 0
      %p162 = por %p160, %p161
      %p163 = scmp.ne.s32.totalorder %s152, %s155
      %p164 = scmp.eq.s32.totalorder %s23, 1
      %p165 = por %p163, %p164
      %p166 = scmp.ne.s32.totalorder %s155, %s156
      %p167 = scmp.eq.s32.totalorder %s23, 0
      %p168 = por %p166, %p167
      %p169 = scmp.ne.s32.totalorder %s155, %s156
      %p170 = scmp.eq.s32.totalorder %s24, 1
      %p171 = por %p169, %p170
      %p173 = scmp.ne.s32.totalorder %s156, %s172
      %p174 = scmp.eq.s32.totalorder %s24, 0
      %p175 = por %p173, %p174
      %p176 = scmp.le.s32.totalorder 1, %s18
      %p177 = scmp.lt.s32.totalorder %s18, 3
      %p178 = pnand %p176, %p177
      %p179 = pneg %p178
      // Predicated region
      $region9: #{tpu_custom_call.1} parent=5 // pred_check
        _
      $region10: #{tpu_custom_call.1} parent=5 // pred_check_branch
        %181 = sbr.rel (%p178) target = $region12
      $region11: #{tpu_custom_call.1} parent=5 // pred_region
        %s182 = ssub.s32 %s18, 1
        // Predicated region
        $region13: #{tpu_custom_call.1} parent=11 // pred_check
          %p183 = pneg %p77
        $region14: #{tpu_custom_call.1} parent=11 // pred_check_branch
          %185 = sbr.rel (%p183) target = $region16
        $region15: #{tpu_custom_call.1} parent=11 // pred_region
          %s187 = ssub.s32 256, 256
          %188 = vsyncadd [#allocation8], %s187
          %s189 = sshll.u32 [#allocation7], 4
          %s190 = int_to_ptr.vmem [resolvable:$true] %s189
          %195 = dma.hbm_to_vmem [thread:$0]  %s1, 256, %s190, [#allocation8], 64, 64, 4
        $region16: #{tpu_custom_call.1} parent=11 // pred_fallthru
          _
        // Predicated region
        $region17: #{tpu_custom_call.1} parent=11 // pred_check
          %p196 = pneg %p98
        $region18: #{tpu_custom_call.1} parent=11 // pred_check_branch
          %198 = sbr.rel (%p196) target = $region20
        $region19: #{tpu_custom_call.1} parent=11 // pred_region
          _
        $region20: #{tpu_custom_call.1} parent=11 // pred_fallthru
          _
        // Predicated region
        $region21: #{tpu_custom_call.1} parent=11 // pred_check
          %p199 = pneg %p119
        $region22: #{tpu_custom_call.1} parent=11 // pred_check_branch
          %201 = sbr.rel (%p199) target = $region24
        $region23: #{tpu_custom_call.1} parent=11 // pred_region
          %s203 = ssub.s32 256, 256
          %204 = vsyncadd [#allocation8], %s203
          %s205 = sshll.u32 [#allocation9], 4
          %s206 = int_to_ptr.vmem [resolvable:$true] %s205
          %211 = dma.hbm_to_vmem [thread:$0]  %s3, 256, %s206, [#allocation8], 64, 64, 4
        $region24: #{tpu_custom_call.1} parent=11 // pred_fallthru
          _
        // Predicated region
        $region25: #{tpu_custom_call.1} parent=11 // pred_check
          %p212 = pneg %p140
        $region26: #{tpu_custom_call.1} parent=11 // pred_check_branch
          %214 = sbr.rel (%p212) target = $region28
        $region27: #{tpu_custom_call.1} parent=11 // pred_region
          _
        $region28: #{tpu_custom_call.1} parent=11 // pred_fallthru
          _
      $region12: #{tpu_custom_call.1} parent=5 // pred_fallthru
        _
      %p215 = scmp.lt.s32.totalorder %s18, 2
      // Predicated region
      $region29: #{tpu_custom_call.1} parent=5 // pred_check
        %p216 = pneg %p215
      $region30: #{tpu_custom_call.1} parent=5 // pred_check_branch
        %218 = sbr.rel (%p216) target = $region32
      $region31: #{tpu_custom_call.1} parent=5 // pred_region
        // Predicated region
        $region33: #{tpu_custom_call.1} parent=31 // pred_check
          %p219 = pneg %p50
        $region34: #{tpu_custom_call.1} parent=31 // pred_check_branch
          %221 = sbr.rel (%p219) target = $region36
        $region35: #{tpu_custom_call.1} parent=31 // pred_region
          %s222 = sand.u32 %s40, 1
          %s223 = scalar_lea.sflag [#allocation5], %s222
          %s224 = sand.u32 %s40, 1
          %s225 = smul.addr %s224, 4
          %s226 = scalar_lea.vmem [#allocation4], %s225
          %s228 = ssub.s32 64, 64
          %229 = vsyncadd %s223, %s228
          %s230 = smul.addr %s25, 64
          %s231 = scalar_lea.hbm %s0, %s230
          %s233 = sshll.u32 %s226, 4
          %s234 = int_to_ptr.vmem [resolvable:$true] %s233
          %236 = dma.hbm_to_vmem [thread:$0]  %s231, 64, %s234, %s223
        $region36: #{tpu_custom_call.1} parent=31 // pred_fallthru
          _
      $region32: #{tpu_custom_call.1} parent=5 // pred_fallthru
        _
      %p237 = scmp.le.s32.totalorder 1, %s18
      %p238 = scmp.lt.s32.totalorder %s18, 3
      %p239 = pnand %p237, %p238
      %p240 = pneg %p239
      // Predicated region
      $region37: #{tpu_custom_call.1} parent=5 // pred_check
        _
      $region38: #{tpu_custom_call.1} parent=5 // pred_check_branch
        %242 = sbr.rel (%p239) target = $region40
      $region39: #{tpu_custom_call.1} parent=5 // pred_region
        %s243 = ssub.s32 %s18, 1
        %s244 = sand.u32 %s43, 1
        %s245 = scalar_lea.sflag [#allocation5], %s244
        %s246 = sand.u32 %s43, 1
        %s247 = smul.addr %s246, 4
        %s248 = scalar_lea.vmem [#allocation4], %s247
        // Predicated region
        $region41: #{tpu_custom_call.1} parent=39 // pred_check
          %p249 = pneg %p56
        $region42: #{tpu_custom_call.1} parent=39 // pred_check_branch
          %251 = sbr.rel (%p249) target = $region44
        $region43: #{tpu_custom_call.1} parent=39 // pred_region
          %252 = dma.done %s245, 64
        $region44: #{tpu_custom_call.1} parent=39 // pred_fallthru
          _
        // Predicated region
        $region45: #{tpu_custom_call.1} parent=39 // pred_check
          %p253 = pneg %p77
        $region46: #{tpu_custom_call.1} parent=39 // pred_check_branch
          %255 = sbr.rel (%p253) target = $region48
        $region47: #{tpu_custom_call.1} parent=39 // pred_region
          %256 = dma.done [#allocation8], 256
        $region48: #{tpu_custom_call.1} parent=39 // pred_fallthru
          _
        // Predicated region
        $region49: #{tpu_custom_call.1} parent=39 // pred_check
          %p257 = pneg %p119
        $region50: #{tpu_custom_call.1} parent=39 // pred_check_branch
          %259 = sbr.rel (%p257) target = $region52
        $region51: #{tpu_custom_call.1} parent=39 // pred_region
          %260 = dma.done [#allocation8], 256
        $region52: #{tpu_custom_call.1} parent=39 // pred_fallthru
          _
        %s261 = sand.u32 %s43, 1
        %s262 = scalar_lea.sflag [#allocation5], %s261
        %s263 = sand.u32 %s43, 1
        %s264 = smul.addr %s263, 4
        %s265 = scalar_lea.vmem [#allocation4], %s264
        %p266 = pneg %p56
        %p267 = pneg %p53
        %p268 = pneg %p77
        %p269 = pneg %p74
        %p270 = pneg %p98
        %p271 = pneg %p95
        %p272 = pneg %p119
        %p273 = pneg %p116
        %p274 = pneg %p140
        %p275 = pneg %p137
        %p276 = pneg %p168
        %p277 = pneg %p165
        %s278 = sand.u32 %s155, 1
        %s279 = scalar_lea.sflag [#allocation6], %s278
        %s280 = sand.u32 %s155, 1
        %s281 = smul.addr %s280, 8
        %s282 = scalar_lea.vmem [#allocation10], %s281
        %p284 = scmp.eq.s32.totalorder %s28, 0
        // Predicated region
        $region53: #{tpu_custom_call.1} parent=39 // pred_check
          %p285 = pneg %p284
        $region54: #{tpu_custom_call.1} parent=39 // pred_check_branch
          %287 = sbr.rel (%p285) target = $region56
        $region55: #{tpu_custom_call.1} parent=39 // pred_region
          %v288 = vld [vmem:[%s248] sm:$0xf]
          %v289 = vld [vmem:[#allocation7] sm:$0xf]
          %v290 = vld [vmem:[#allocation7 + $0x4] sm:$0xf]
          %v291 = vld [vmem:[#allocation7 + $0x8] sm:$0xf]
          %v292 = vld [vmem:[#allocation7 + $0xc] sm:$0xf]
          %v293 = vld [vmem:[%s2] sm:$0x1]
          %v295 = vlaneseq
          %v296 = vshrl.u32 %v295, 7
          %v297 = vsub.s32 0, %v296
          %v298 = vrot.slane %v293, %v297
          %v303 = vunpack.c.l.b16 %v289
          %v304 = vunpack.c.l.b16 %v290
          %v305 = vunpack.c.l.b16 %v291
          %v306 = vunpack.c.l.b16 %v292
          %v307 = vpack.c.b16 %v304, %v303
          %v308 = vpack.c.b16 %v306, %v305
          %309 = vrot.lane.b32.xlu0 %v307, 96
          %v310 = vpop.permute.xlu0 %309
          %311 = vrot.lane.b32.xlu0 %v308, 96
          %v312 = vpop.permute.xlu0 %311
          %315 = vrot.lane.b32.xlu0 %v298, 96
          %v316 = vpop.permute.xlu0 %315
          %vm318 = vcmask 261120
          %v320 = vsel %vm318, %v288, 0
          %322 = vmatprep.subr.bf16.mxu0 0
          %323 = vmatpush1.bf16.msra.mxu0 %v310
          %324 = vmatprep.subr.bf16.mxu0 0
          %325 = vmatpush1.bf16.msra.mxu0 %v312
          %326 = vmatprep.subr.bf16.mxu0 0
          %327 = vmatpush1.bf16.msra.mxu0 0
          %328 = vmatprep.subr.bf16.mxu0 0
          %329 = vmatpush1.bf16.msra.mxu0 0
          %330 = vmatprep.subr.bf16.mxu0 0
          %331 = vmatpush1.bf16.msra.mxu0 0
          %332 = vmatprep.subr.bf16.mxu0 0
          %333 = vmatpush1.bf16.msra.mxu0 0
          %334 = vmatprep.subr.bf16.mxu0 0
          %335 = vmatpush1.bf16.msra.mxu0 0
          %336 = vmatprep.subr.bf16.mxu0 0
          %337 = vmatpush1.bf16.msra.mxu0 0
          %338 = vmatprep.subr.bf16.mxu0 0
          %339 = vmatpush1.bf16.msra.mxu0 0
          %340 = vmatprep.subr.bf16.mxu0 0
          %341 = vmatpush1.bf16.msra.mxu0 0
          %342 = vmatprep.subr.bf16.mxu0 0
          %343 = vmatpush1.bf16.msra.mxu0 0
          %344 = vmatprep.subr.bf16.mxu0 0
          %345 = vmatpush1.bf16.msra.mxu0 0
          %346 = vmatprep.subr.bf16.mxu0 0
          %347 = vmatpush1.bf16.msra.mxu0 0
          %348 = vmatprep.subr.bf16.mxu0 0
          %349 = vmatpush1.bf16.msra.mxu0 0
          %350 = vmatprep.subr.bf16.mxu0 0
          %351 = vmatpush1.bf16.msra.mxu0 0
          %352 = vmatprep.subr.bf16.mxu0 0
          %353 = vmatpush1.bf16.msra.mxu0 0
          %354 = vmatprep.mubr.bf16.mxu0 0
          %355 = vmatmul.mubr.bf16.gmra.mrb[0].mxu0 %v320
          %v356 = vpop.f32.mrb[0].mxu0
          %v357 = vadd.f32 %v316, %v356
          %v358 = vpop.f32.mrb[0].mxu0
          %v359 = vpop.f32.mrb[0].mxu0
          %v360 = vpop.f32.mrb[0].mxu0
          %361 = vdwg.mxu0
          %v362 = vpack.c.bf16 %v357, %v357
          %vm363 = vcmask 257024
          %364 = vst.msk [vmem:[#allocation2] sm:$0xf] %vm363, %v362
          %v365 = vld [vmem:[#allocation7] sm:$0xf]
          %v366 = vld [vmem:[#allocation7 + $0x4] sm:$0xf]
          %v367 = vld [vmem:[#allocation7 + $0x8] sm:$0xf]
          %v368 = vld [vmem:[#allocation7 + $0xc] sm:$0xf]
          %v369 = vld [vmem:[%s2] sm:$0x1]
          %v371 = vlaneseq
          %v372 = vshrl.u32 %v371, 7
          %v373 = vsub.s32 0, %v372
          %v374 = vrot.slane %v369, %v373
          %v379 = vunpack.c.l.b16 %v365
          %v380 = vunpack.c.l.b16 %v366
          %v381 = vunpack.c.l.b16 %v367
          %v382 = vunpack.c.l.b16 %v368
          %v383 = vpack.c.b16 %v380, %v379
          %v384 = vpack.c.b16 %v382, %v381
          %385 = vrot.lane.b32.xlu0 %v383, 64
          %v386 = vpop.permute.xlu0 %385
          %387 = vrot.lane.b32.xlu0 %v384, 64
          %v388 = vpop.permute.xlu0 %387
          %391 = vrot.lane.b32.xlu0 %v374, 64
          %v392 = vpop.permute.xlu0 %391
          %394 = vmatprep.subr.bf16.mxu0 0
          %395 = vmatpush1.bf16.msra.mxu0 %v386
          %396 = vmatprep.subr.bf16.mxu0 0
          %397 = vmatpush1.bf16.msra.mxu0 %v388
          %398 = vmatprep.subr.bf16.mxu0 0
          %399 = vmatpush1.bf16.msra.mxu0 0
          %400 = vmatprep.subr.bf16.mxu0 0
          %401 = vmatpush1.bf16.msra.mxu0 0
          %402 = vmatprep.subr.bf16.mxu0 0
          %403 = vmatpush1.bf16.msra.mxu0 0
          %404 = vmatprep.subr.bf16.mxu0 0
          %405 = vmatpush1.bf16.msra.mxu0 0
          %406 = vmatprep.subr.bf16.mxu0 0
          %407 = vmatpush1.bf16.msra.mxu0 0
          %408 = vmatprep.subr.bf16.mxu0 0
          %409 = vmatpush1.bf16.msra.mxu0 0
          %410 = vmatprep.subr.bf16.mxu0 0
          %411 = vmatpush1.bf16.msra.mxu0 0
          %412 = vmatprep.subr.bf16.mxu0 0
          %413 = vmatpush1.bf16.msra.mxu0 0
          %414 = vmatprep.subr.bf16.mxu0 0
          %415 = vmatpush1.bf16.msra.mxu0 0
          %416 = vmatprep.subr.bf16.mxu0 0
          %417 = vmatpush1.bf16.msra.mxu0 0
          %418 = vmatprep.subr.bf16.mxu0 0
          %419 = vmatpush1.bf16.msra.mxu0 0
          %420 = vmatprep.subr.bf16.mxu0 0
          %421 = vmatpush1.bf16.msra.mxu0 0
          %422 = vmatprep.subr.bf16.mxu0 0
          %423 = vmatpush1.bf16.msra.mxu0 0
          %424 = vmatprep.subr.bf16.mxu0 0
          %425 = vmatpush1.bf16.msra.mxu0 0
          %426 = vmatprep.mubr.bf16.mxu0 0
          %427 = vmatmul.mubr.bf16.gmra.mrb[0].mxu0 %v320
          %v428 = vpop.f32.mrb[0].mxu0
          %v429 = vadd.f32 %v392, %v428
          %v430 = vpop.f32.mrb[0].mxu0
          %v431 = vpop.f32.mrb[0].mxu0
          %v432 = vpop.f32.mrb[0].mxu0
          %433 = vdwg.mxu0
          %v434 = vpack.c.bf16 %v429, %v429
          %v436 = vunpack.c.l.b16 %v434
          %v437 = vpack.c.b16 %v436, %v436
          %438 = vrot.lane.b32.xlu0 %v437, 32
          %v439 = vpop.permute.xlu0 %438
          %vm441 = vcmask 519424
          %442 = vst.msk [vmem:[#allocation2] sm:$0xf] %vm441, %v439
        $region56: #{tpu_custom_call.1} parent=39 // pred_fallthru
          _
        %s443 = smul.u32 %s28, 8
        %s444 = sshra.s32 %s443, 3
        %s445 = sand.u32 %s443, 7
        %s446 = smul.addr %s444, 4
        %s447 = scalar_lea.vmem %s248, %s446 [#allocation4]
        %v448 = vld [vmem:[%s447] sm:$0xf]
        %v449 = vld [vmem:[#allocation7] sm:$0xf]
        %v450 = vld [vmem:[#allocation7 + $0x4] sm:$0xf]
        %v451 = vld [vmem:[#allocation7 + $0x8] sm:$0xf]
        %v452 = vld [vmem:[#allocation7 + $0xc] sm:$0xf]
        %v453 = vld [vmem:[%s2] sm:$0x1]
        %v455 = vlaneseq
        %v456 = vshrl.u32 %v455, 7
        %v457 = vsub.s32 0, %v456
        %v458 = vrot.slane %v453, %v457
        %v464 = vunpack.c.l.b16 %v449
        %v465 = vunpack.c.l.b16 %v450
        %v466 = vunpack.c.l.b16 %v451
        %v467 = vunpack.c.l.b16 %v452
        %v468 = vpack.c.b16 %v465, %v464
        %v469 = vpack.c.b16 %v467, %v466
        %vm472 = vcmask 261120
        %v474 = vsel %vm472, %v448, 0
        %476 = vmatprep.subr.bf16.mxu0 0
        %477 = vmatpush1.bf16.msra.mxu0 %v468
        %478 = vmatprep.subr.bf16.mxu0 0
        %479 = vmatpush1.bf16.msra.mxu0 %v469
        %480 = vmatprep.subr.bf16.mxu0 0
        %481 = vmatpush1.bf16.msra.mxu0 0
        %482 = vmatprep.subr.bf16.mxu0 0
        %483 = vmatpush1.bf16.msra.mxu0 0
        %484 = vmatprep.subr.bf16.mxu0 0
        %485 = vmatpush1.bf16.msra.mxu0 0
        %486 = vmatprep.subr.bf16.mxu0 0
        %487 = vmatpush1.bf16.msra.mxu0 0
        %488 = vmatprep.subr.bf16.mxu0 0
        %489 = vmatpush1.bf16.msra.mxu0 0
        %490 = vmatprep.subr.bf16.mxu0 0
        %491 = vmatpush1.bf16.msra.mxu0 0
        %492 = vmatprep.subr.bf16.mxu0 0
        %493 = vmatpush1.bf16.msra.mxu0 0
        %494 = vmatprep.subr.bf16.mxu0 0
        %495 = vmatpush1.bf16.msra.mxu0 0
        %496 = vmatprep.subr.bf16.mxu0 0
        %497 = vmatpush1.bf16.msra.mxu0 0
        %498 = vmatprep.subr.bf16.mxu0 0
        %499 = vmatpush1.bf16.msra.mxu0 0
        %500 = vmatprep.subr.bf16.mxu0 0
        %501 = vmatpush1.bf16.msra.mxu0 0
        %502 = vmatprep.subr.bf16.mxu0 0
        %503 = vmatpush1.bf16.msra.mxu0 0
        %504 = vmatprep.subr.bf16.mxu0 0
        %505 = vmatpush1.bf16.msra.mxu0 0
        %506 = vmatprep.subr.bf16.mxu0 0
        %507 = vmatpush1.bf16.msra.mxu0 0
        %508 = vmatprep.mubr.bf16.mxu0 0
        %509 = vmatmul.mubr.bf16.gmra.mrb[0].mxu0 %v474
        %v510 = vpop.f32.mrb[0].mxu0
        %v511 = vadd.f32 %v458, %v510
        %v512 = vpop.f32.mrb[0].mxu0
        %v513 = vpop.f32.mrb[0].mxu0
        %v514 = vpop.f32.mrb[0].mxu0
        %515 = vdwg.mxu0
        %v516 = vpack.c.bf16 %v511, %v511
        %v517 = vld [vmem:[#allocation2] sm:$0xf]
        %vm518 = vcmask 64512
        %v520 = vsel %vm518, %v516, 0
        %v523 = vsel %vm518, %v517, 0
        %525 = vmatprep.subr.bf16.mxu0 0
        %526 = vmatpush1.bf16.xpose.msra.mxu0 %v523
        %527 = vmatprep.subr.bf16.mxu0 0
        %528 = vmatpush1.bf16.xpose.msra.mxu0 0
        %529 = vmatprep.subr.bf16.mxu0 0
        %530 = vmatpush1.bf16.xpose.msra.mxu0 0
        %531 = vmatprep.subr.bf16.mxu0 0
        %532 = vmatpush1.bf16.xpose.msra.mxu0 0
        %533 = vmatprep.subr.bf16.mxu0 0
        %534 = vmatpush1.bf16.xpose.msra.mxu0 0
        %535 = vmatprep.subr.bf16.mxu0 0
        %536 = vmatpush1.bf16.xpose.msra.mxu0 0
        %537 = vmatprep.subr.bf16.mxu0 0
        %538 = vmatpush1.bf16.xpose.msra.mxu0 0
        %539 = vmatprep.subr.bf16.mxu0 0
        %540 = vmatpush1.bf16.xpose.msra.mxu0 0
        %541 = vmatprep.subr.bf16.mxu0 0
        %542 = vmatpush1.bf16.xpose.msra.mxu0 0
        %543 = vmatprep.subr.bf16.mxu0 0
        %544 = vmatpush1.bf16.xpose.msra.mxu0 0
        %545 = vmatprep.subr.bf16.mxu0 0
        %546 = vmatpush1.bf16.xpose.msra.mxu0 0
        %547 = vmatprep.subr.bf16.mxu0 0
        %548 = vmatpush1.bf16.xpose.msra.mxu0 0
        %549 = vmatprep.subr.bf16.mxu0 0
        %550 = vmatpush1.bf16.xpose.msra.mxu0 0
        %551 = vmatprep.subr.bf16.mxu0 0
        %552 = vmatpush1.bf16.xpose.msra.mxu0 0
        %553 = vmatprep.subr.bf16.mxu0 0
        %554 = vmatpush1.bf16.xpose.msra.mxu0 0
        %555 = vmatprep.subr.bf16.mxu0 0
        %556 = vmatpush1.bf16.xpose.msra.mxu0 0
        %557 = vmatprep.mubr.bf16.mxu0 0
        %558 = vmatmul.mubr.bf16.gmra.mrb[0].mxu0 %v520
        %v559 = vpop.f32.mrb[0].mxu0
        %v560 = vadd.f32 0.0, %v559
        %v561 = vpop.f32.mrb[0].mxu0
        %v562 = vpop.f32.mrb[0].mxu0
        %v563 = vpop.f32.mrb[0].mxu0
        %564 = vdwg.mxu0
        %v565 = vsel %vm518, %v560, -inf
        %566 = vmax.xlane.f32.xlu0 %v565
        %v567 = vpop.xlane.xlu0 %566
        %v568 = vsub.f32 %v560, %v567
        %v569 = vmul.f32 %v568, 1.442695
        %v570 = vpow.pop %v569
        %v571 = vsel %vm518, %v570, 0.0
        %572 = vadd.xlane.f32.xlu0 %v571
        %v573 = vpop.xlane.xlu0 %572
        %v574 = vrcp.pop %v573
        %v575 = vmul.f32 %v570, %v574
        %v576 = vpack.c.bf16 %v575, %v575
        %v578 = vunpack.c.l.b16 %v517
        %v579 = vpack.c.b16 %v578, %v578
        %580 = vrot.lane.b32.xlu0 %v579, 96
        %v581 = vpop.permute.xlu0 %580
        %v583 = vsel %vm518, %v576, 0
        %vm585 = vcmask 1043456
        %v587 = vsel %vm585, %v581, 0
        %589 = vmatprep.subr.bf16.mxu0 0
        %590 = vmatpush1.bf16.msra.mxu0 %v587
        %591 = vmatprep.subr.bf16.mxu0 0
        %592 = vmatpush1.bf16.msra.mxu0 0
        %593 = vmatprep.subr.bf16.mxu0 0
        %594 = vmatpush1.bf16.msra.mxu0 0
        %595 = vmatprep.subr.bf16.mxu0 0
        %596 = vmatpush1.bf16.msra.mxu0 0
        %597 = vmatprep.subr.bf16.mxu0 0
        %598 = vmatpush1.bf16.msra.mxu0 0
        %599 = vmatprep.subr.bf16.mxu0 0
        %600 = vmatpush1.bf16.msra.mxu0 0
        %601 = vmatprep.subr.bf16.mxu0 0
        %602 = vmatpush1.bf16.msra.mxu0 0
        %603 = vmatprep.subr.bf16.mxu0 0
        %604 = vmatpush1.bf16.msra.mxu0 0
        %605 = vmatprep.subr.bf16.mxu0 0
        %606 = vmatpush1.bf16.msra.mxu0 0
        %607 = vmatprep.subr.bf16.mxu0 0
        %608 = vmatpush1.bf16.msra.mxu0 0
        %609 = vmatprep.subr.bf16.mxu0 0
        %610 = vmatpush1.bf16.msra.mxu0 0
        %611 = vmatprep.subr.bf16.mxu0 0
        %612 = vmatpush1.bf16.msra.mxu0 0
        %613 = vmatprep.subr.bf16.mxu0 0
        %614 = vmatpush1.bf16.msra.mxu0 0
        %615 = vmatprep.subr.bf16.mxu0 0
        %616 = vmatpush1.bf16.msra.mxu0 0
        %617 = vmatprep.subr.bf16.mxu0 0
        %618 = vmatpush1.bf16.msra.mxu0 0
        %619 = vmatprep.subr.bf16.mxu0 0
        %620 = vmatpush1.bf16.msra.mxu0 0
        %621 = vmatprep.mubr.bf16.mxu0 0
        %622 = vmatmul.mubr.bf16.gmra.mrb[0].mxu0 %v583
        %v623 = vpop.f32.mrb[0].mxu0
        %v624 = vadd.f32 0.0, %v623
        %v625 = vpop.f32.mrb[0].mxu0
        %v626 = vpop.f32.mrb[0].mxu0
        %v627 = vpop.f32.mrb[0].mxu0
        %628 = vdwg.mxu0
        %v629 = vpack.c.bf16 %v624, %v624
        %vm630 = vcmask 60416
        %631 = vst.msk [vmem:[#allocation3] sm:$0xf] %vm630, %v629
        %v632 = vld [vmem:[#allocation2] sm:$0xf]
        %634 = vrot.lane.b32.xlu0 %v516, 120
        %v635 = vpop.permute.xlu0 %634
        %v637 = vunpack.c.l.b16 %v632
        %v638 = vpack.c.b16 %v637, %v637
        %639 = vrot.lane.b32.xlu0 %v638, 120
        %v640 = vpop.permute.xlu0 %639
        %v642 = vsel %vm518, %v635, 0
        %v645 = vsel %vm518, %v640, 0
        %647 = vmatprep.subr.bf16.mxu0 0
        %648 = vmatpush1.bf16.xpose.msra.mxu0 %v645
        %649 = vmatprep.subr.bf16.mxu0 0
        %650 = vmatpush1.bf16.xpose.msra.mxu0 0
        %651 = vmatprep.subr.bf16.mxu0 0
        %652 = vmatpush1.bf16.xpose.msra.mxu0 0
        %653 = vmatprep.subr.bf16.mxu0 0
        %654 = vmatpush1.bf16.xpose.msra.mxu0 0
        %655 = vmatprep.subr.bf16.mxu0 0
        %656 = vmatpush1.bf16.xpose.msra.mxu0 0
        %657 = vmatprep.subr.bf16.mxu0 0
        %658 = vmatpush1.bf16.xpose.msra.mxu0 0
        %659 = vmatprep.subr.bf16.mxu0 0
        %660 = vmatpush1.bf16.xpose.msra.mxu0 0
        %661 = vmatprep.subr.bf16.mxu0 0
        %662 = vmatpush1.bf16.xpose.msra.mxu0 0
        %663 = vmatprep.subr.bf16.mxu0 0
        %664 = vmatpush1.bf16.xpose.msra.mxu0 0
        %665 = vmatprep.subr.bf16.mxu0 0
        %666 = vmatpush1.bf16.xpose.msra.mxu0 0
        %667 = vmatprep.subr.bf16.mxu0 0
        %668 = vmatpush1.bf16.xpose.msra.mxu0 0
        %669 = vmatprep.subr.bf16.mxu0 0
        %670 = vmatpush1.bf16.xpose.msra.mxu0 0
        %671 = vmatprep.subr.bf16.mxu0 0
        %672 = vmatpush1.bf16.xpose.msra.mxu0 0
        %673 = vmatprep.subr.bf16.mxu0 0
        %674 = vmatpush1.bf16.xpose.msra.mxu0 0
        %675 = vmatprep.subr.bf16.mxu0 0
        %676 = vmatpush1.bf16.xpose.msra.mxu0 0
        %677 = vmatprep.subr.bf16.mxu0 0
        %678 = vmatpush1.bf16.xpose.msra.mxu0 0
        %679 = vmatprep.mubr.bf16.mxu0 0
        %680 = vmatmul.mubr.bf16.gmra.mrb[0].mxu0 %v642
        %v681 = vpop.f32.mrb[0].mxu0
        %v682 = vadd.f32 0.0, %v681
        %v683 = vpop.f32.mrb[0].mxu0
        %v684 = vpop.f32.mrb[0].mxu0
        %v685 = vpop.f32.mrb[0].mxu0
        %686 = vdwg.mxu0
        %v687 = vsel %vm518, %v682, -inf
        %688 = vmax.xlane.f32.xlu0 %v687
        %v689 = vpop.xlane.xlu0 %688
        %v690 = vsub.f32 %v682, %v689
        %v691 = vmul.f32 %v690, 1.442695
        %v692 = vpow.pop %v691
        %v693 = vsel %vm518, %v692, 0.0
        %694 = vadd.xlane.f32.xlu0 %v693
        %v695 = vpop.xlane.xlu0 %694
        %v696 = vrcp.pop %v695
        %v697 = vmul.f32 %v692, %v696
        %v698 = vpack.c.bf16 %v697, %v697
        %699 = vrot.lane.b32.xlu0 %v638, 88
        %v700 = vpop.permute.xlu0 %699
        %v702 = vsel %vm518, %v698, 0
        %v705 = vsel %vm585, %v700, 0
        %707 = vmatprep.subr.bf16.mxu0 0
        %708 = vmatpush1.bf16.msra.mxu0 %v705
        %709 = vmatprep.subr.bf16.mxu0 0
        %710 = vmatpush1.bf16.msra.mxu0 0
        %711 = vmatprep.subr.bf16.mxu0 0
        %712 = vmatpush1.bf16.msra.mxu0 0
        %713 = vmatprep.subr.bf16.mxu0 0
        %714 = vmatpush1.bf16.msra.mxu0 0
        %715 = vmatprep.subr.bf16.mxu0 0
        %716 = vmatpush1.bf16.msra.mxu0 0
        %717 = vmatprep.subr.bf16.mxu0 0
        %718 = vmatpush1.bf16.msra.mxu0 0
        %719 = vmatprep.subr.bf16.mxu0 0
        %720 = vmatpush1.bf16.msra.mxu0 0
        %721 = vmatprep.subr.bf16.mxu0 0
        %722 = vmatpush1.bf16.msra.mxu0 0
        %723 = vmatprep.subr.bf16.mxu0 0
        %724 = vmatpush1.bf16.msra.mxu0 0
        %725 = vmatprep.subr.bf16.mxu0 0
        %726 = vmatpush1.bf16.msra.mxu0 0
        %727 = vmatprep.subr.bf16.mxu0 0
        %728 = vmatpush1.bf16.msra.mxu0 0
        %729 = vmatprep.subr.bf16.mxu0 0
        %730 = vmatpush1.bf16.msra.mxu0 0
        %731 = vmatprep.subr.bf16.mxu0 0
        %732 = vmatpush1.bf16.msra.mxu0 0
        %733 = vmatprep.subr.bf16.mxu0 0
        %734 = vmatpush1.bf16.msra.mxu0 0
        %735 = vmatprep.subr.bf16.mxu0 0
        %736 = vmatpush1.bf16.msra.mxu0 0
        %737 = vmatprep.subr.bf16.mxu0 0
        %738 = vmatpush1.bf16.msra.mxu0 0
        %739 = vmatprep.mubr.bf16.mxu0 0
        %740 = vmatmul.mubr.bf16.gmra.mrb[0].mxu0 %v702
        %v741 = vpop.f32.mrb[0].mxu0
        %v742 = vadd.f32 0.0, %v741
        %v743 = vpop.f32.mrb[0].mxu0
        %v744 = vpop.f32.mrb[0].mxu0
        %v745 = vpop.f32.mrb[0].mxu0
        %746 = vdwg.mxu0
        %v747 = vpack.c.bf16 %v742, %v742
        %v749 = vunpack.c.l.b16 %v747
        %v750 = vpack.c.b16 %v749, %v749
        %751 = vrot.lane.b32.xlu0 %v750, 8
        %v752 = vpop.permute.xlu0 %751
        %vm754 = vcmask 126016
        %755 = vst.msk [vmem:[#allocation3] sm:$0xf] %vm754, %v752
        %v756 = vld [vmem:[#allocation2] sm:$0xf]
        %757 = vrot.lane.b32.xlu0 %v516, 112
        %v758 = vpop.permute.xlu0 %757
        %v760 = vunpack.c.l.b16 %v756
        %v761 = vpack.c.b16 %v760, %v760
        %762 = vrot.lane.b32.xlu0 %v761, 112
        %v763 = vpop.permute.xlu0 %762
        %v765 = vsel %vm518, %v758, 0
        %v768 = vsel %vm518, %v763, 0
        %770 = vmatprep.subr.bf16.mxu0 0
        %771 = vmatpush1.bf16.xpose.msra.mxu0 %v768
        %772 = vmatprep.subr.bf16.mxu0 0
        %773 = vmatpush1.bf16.xpose.msra.mxu0 0
        %774 = vmatprep.subr.bf16.mxu0 0
        %775 = vmatpush1.bf16.xpose.msra.mxu0 0
        %776 = vmatprep.subr.bf16.mxu0 0
        %777 = vmatpush1.bf16.xpose.msra.mxu0 0
        %778 = vmatprep.subr.bf16.mxu0 0
        %779 = vmatpush1.bf16.xpose.msra.mxu0 0
        %780 = vmatprep.subr.bf16.mxu0 0
        %781 = vmatpush1.bf16.xpose.msra.mxu0 0
        %782 = vmatprep.subr.bf16.mxu0 0
        %783 = vmatpush1.bf16.xpose.msra.mxu0 0
        %784 = vmatprep.subr.bf16.mxu0 0
        %785 = vmatpush1.bf16.xpose.msra.mxu0 0
        %786 = vmatprep.subr.bf16.mxu0 0
        %787 = vmatpush1.bf16.xpose.msra.mxu0 0
        %788 = vmatprep.subr.bf16.mxu0 0
        %789 = vmatpush1.bf16.xpose.msra.mxu0 0
        %790 = vmatprep.subr.bf16.mxu0 0
        %791 = vmatpush1.bf16.xpose.msra.mxu0 0
        %792 = vmatprep.subr.bf16.mxu0 0
        %793 = vmatpush1.bf16.xpose.msra.mxu0 0
        %794 = vmatprep.subr.bf16.mxu0 0
        %795 = vmatpush1.bf16.xpose.msra.mxu0 0
        %796 = vmatprep.subr.bf16.mxu0 0
        %797 = vmatpush1.bf16.xpose.msra.mxu0 0
        %798 = vmatprep.subr.bf16.mxu0 0
        %799 = vmatpush1.bf16.xpose.msra.mxu0 0
        %800 = vmatprep.subr.bf16.mxu0 0
        %801 = vmatpush1.bf16.xpose.msra.mxu0 0
        %802 = vmatprep.mubr.bf16.mxu0 0
        %803 = vmatmul.mubr.bf16.gmra.mrb[0].mxu0 %v765
        %v804 = vpop.f32.mrb[0].mxu0
        %v805 = vadd.f32 0.0, %v804
        %v806 = vpop.f32.mrb[0].mxu0
        %v807 = vpop.f32.mrb[0].mxu0
        %v808 = vpop.f32.mrb[0].mxu0
        %809 = vdwg.mxu0
        %v810 = vsel %vm518, %v805, -inf
        %811 = vmax.xlane.f32.xlu0 %v810
        %v812 = vpop.xlane.xlu0 %811
        %v813 = vsub.f32 %v805, %v812
        %v814 = vmul.f32 %v813, 1.442695
        %v815 = vpow.pop %v814
        %v816 = vsel %vm518, %v815, 0.0
        %817 = vadd.xlane.f32.xlu0 %v816
        %v818 = vpop.xlane.xlu0 %817
        %v819 = vrcp.pop %v818
        %v820 = vmul.f32 %v815, %v819
        %v821 = vpack.c.bf16 %v820, %v820
        %822 = vrot.lane.b32.xlu0 %v761, 80
        %v823 = vpop.permute.xlu0 %822
        %v825 = vsel %vm518, %v821, 0
        %v828 = vsel %vm585, %v823, 0
        %830 = vmatprep.subr.bf16.mxu0 0
        %831 = vmatpush1.bf16.msra.mxu0 %v828
        %832 = vmatprep.subr.bf16.mxu0 0
        %833 = vmatpush1.bf16.msra.mxu0 0
        %834 = vmatprep.subr.bf16.mxu0 0
        %835 = vmatpush1.bf16.msra.mxu0 0
        %836 = vmatprep.subr.bf16.mxu0 0
        %837 = vmatpush1.bf16.msra.mxu0 0
        %838 = vmatprep.subr.bf16.mxu0 0
        %839 = vmatpush1.bf16.msra.mxu0 0
        %840 = vmatprep.subr.bf16.mxu0 0
        %841 = vmatpush1.bf16.msra.mxu0 0
        %842 = vmatprep.subr.bf16.mxu0 0
        %843 = vmatpush1.bf16.msra.mxu0 0
        %844 = vmatprep.subr.bf16.mxu0 0
        %845 = vmatpush1.bf16.msra.mxu0 0
        %846 = vmatprep.subr.bf16.mxu0 0
        %847 = vmatpush1.bf16.msra.mxu0 0
        %848 = vmatprep.subr.bf16.mxu0 0
        %849 = vmatpush1.bf16.msra.mxu0 0
        %850 = vmatprep.subr.bf16.mxu0 0
        %851 = vmatpush1.bf16.msra.mxu0 0
        %852 = vmatprep.subr.bf16.mxu0 0
        %853 = vmatpush1.bf16.msra.mxu0 0
        %854 = vmatprep.subr.bf16.mxu0 0
        %855 = vmatpush1.bf16.msra.mxu0 0
        %856 = vmatprep.subr.bf16.mxu0 0
        %857 = vmatpush1.bf16.msra.mxu0 0
        %858 = vmatprep.subr.bf16.mxu0 0
        %859 = vmatpush1.bf16.msra.mxu0 0
        %860 = vmatprep.subr.bf16.mxu0 0
        %861 = vmatpush1.bf16.msra.mxu0 0
        %862 = vmatprep.mubr.bf16.mxu0 0
        %863 = vmatmul.mubr.bf16.gmra.mrb[0].mxu0 %v825
        %v864 = vpop.f32.mrb[0].mxu0
        %v865 = vadd.f32 0.0, %v864
        %v866 = vpop.f32.mrb[0].mxu0
        %v867 = vpop.f32.mrb[0].mxu0
        %v868 = vpop.f32.mrb[0].mxu0
        %869 = vdwg.mxu0
        %v870 = vpack.c.bf16 %v865, %v865
        %v872 = vunpack.c.l.b16 %v870
        %v873 = vpack.c.b16 %v872, %v872
        %874 = vrot.lane.b32.xlu0 %v873, 16
        %v875 = vpop.permute.xlu0 %874
        %vm877 = vcmask 191616
        %878 = vst.msk [vmem:[#allocation3] sm:$0xf] %vm877, %v875
        %v879 = vld [vmem:[#allocation2] sm:$0xf]
        %880 = vrot.lane.b32.xlu0 %v516, 104
        %v881 = vpop.permute.xlu0 %880
        %v883 = vunpack.c.l.b16 %v879
        %v884 = vpack.c.b16 %v883, %v883
        %885 = vrot.lane.b32.xlu0 %v884, 104
        %v886 = vpop.permute.xlu0 %885
        %v888 = vsel %vm518, %v881, 0
        %v891 = vsel %vm518, %v886, 0
        %893 = vmatprep.subr.bf16.mxu0 0
        %894 = vmatpush1.bf16.xpose.msra.mxu0 %v891
        %895 = vmatprep.subr.bf16.mxu0 0
        %896 = vmatpush1.bf16.xpose.msra.mxu0 0
        %897 = vmatprep.subr.bf16.mxu0 0
        %898 = vmatpush1.bf16.xpose.msra.mxu0 0
        %899 = vmatprep.subr.bf16.mxu0 0
        %900 = vmatpush1.bf16.xpose.msra.mxu0 0
        %901 = vmatprep.subr.bf16.mxu0 0
        %902 = vmatpush1.bf16.xpose.msra.mxu0 0
        %903 = vmatprep.subr.bf16.mxu0 0
        %904 = vmatpush1.bf16.xpose.msra.mxu0 0
        %905 = vmatprep.subr.bf16.mxu0 0
        %906 = vmatpush1.bf16.xpose.msra.mxu0 0
        %907 = vmatprep.subr.bf16.mxu0 0
        %908 = vmatpush1.bf16.xpose.msra.mxu0 0
        %909 = vmatprep.subr.bf16.mxu0 0
        %910 = vmatpush1.bf16.xpose.msra.mxu0 0
        %911 = vmatprep.subr.bf16.mxu0 0
        %912 = vmatpush1.bf16.xpose.msra.mxu0 0
        %913 = vmatprep.subr.bf16.mxu0 0
        %914 = vmatpush1.bf16.xpose.msra.mxu0 0
        %915 = vmatprep.subr.bf16.mxu0 0
        %916 = vmatpush1.bf16.xpose.msra.mxu0 0
        %917 = vmatprep.subr.bf16.mxu0 0
        %918 = vmatpush1.bf16.xpose.msra.mxu0 0
        %919 = vmatprep.subr.bf16.mxu0 0
        %920 = vmatpush1.bf16.xpose.msra.mxu0 0
        %921 = vmatprep.subr.bf16.mxu0 0
        %922 = vmatpush1.bf16.xpose.msra.mxu0 0
        %923 = vmatprep.subr.bf16.mxu0 0
        %924 = vmatpush1.bf16.xpose.msra.mxu0 0
        %925 = vmatprep.mubr.bf16.mxu0 0
        %926 = vmatmul.mubr.bf16.gmra.mrb[0].mxu0 %v888
        %v927 = vpop.f32.mrb[0].mxu0
        %v928 = vadd.f32 0.0, %v927
        %v929 = vpop.f32.mrb[0].mxu0
        %v930 = vpop.f32.mrb[0].mxu0
        %v931 = vpop.f32.mrb[0].mxu0
        %932 = vdwg.mxu0
        %v933 = vsel %vm518, %v928, -inf
        %934 = vmax.xlane.f32.xlu0 %v933
        %v935 = vpop.xlane.xlu0 %934
        %v936 = vsub.f32 %v928, %v935
        %v937 = vmul.f32 %v936, 1.442695
        %v938 = vpow.pop %v937
        %v939 = vsel %vm518, %v938, 0.0
        %940 = vadd.xlane.f32.xlu0 %v939
        %v941 = vpop.xlane.xlu0 %940
        %v942 = vrcp.pop %v941
        %v943 = vmul.f32 %v938, %v942
        %v944 = vpack.c.bf16 %v943, %v943
        %945 = vrot.lane.b32.xlu0 %v884, 72
        %v946 = vpop.permute.xlu0 %945
        %v948 = vsel %vm518, %v944, 0
        %v951 = vsel %vm585, %v946, 0
        %953 = vmatprep.subr.bf16.mxu0 0
        %954 = vmatpush1.bf16.msra.mxu0 %v951
        %955 = vmatprep.subr.bf16.mxu0 0
        %956 = vmatpush1.bf16.msra.mxu0 0
        %957 = vmatprep.subr.bf16.mxu0 0
        %958 = vmatpush1.bf16.msra.mxu0 0
        %959 = vmatprep.subr.bf16.mxu0 0
        %960 = vmatpush1.bf16.msra.mxu0 0
        %961 = vmatprep.subr.bf16.mxu0 0
        %962 = vmatpush1.bf16.msra.mxu0 0
        %963 = vmatprep.subr.bf16.mxu0 0
        %964 = vmatpush1.bf16.msra.mxu0 0
        %965 = vmatprep.subr.bf16.mxu0 0
        %966 = vmatpush1.bf16.msra.mxu0 0
        %967 = vmatprep.subr.bf16.mxu0 0
        %968 = vmatpush1.bf16.msra.mxu0 0
        %969 = vmatprep.subr.bf16.mxu0 0
        %970 = vmatpush1.bf16.msra.mxu0 0
        %971 = vmatprep.subr.bf16.mxu0 0
        %972 = vmatpush1.bf16.msra.mxu0 0
        %973 = vmatprep.subr.bf16.mxu0 0
        %974 = vmatpush1.bf16.msra.mxu0 0
        %975 = vmatprep.subr.bf16.mxu0 0
        %976 = vmatpush1.bf16.msra.mxu0 0
        %977 = vmatprep.subr.bf16.mxu0 0
        %978 = vmatpush1.bf16.msra.mxu0 0
        %979 = vmatprep.subr.bf16.mxu0 0
        %980 = vmatpush1.bf16.msra.mxu0 0
        %981 = vmatprep.subr.bf16.mxu0 0
        %982 = vmatpush1.bf16.msra.mxu0 0
        %983 = vmatprep.subr.bf16.mxu0 0
        %984 = vmatpush1.bf16.msra.mxu0 0
        %985 = vmatprep.mubr.bf16.mxu0 0
        %986 = vmatmul.mubr.bf16.gmra.mrb[0].mxu0 %v948
        %v987 = vpop.f32.mrb[0].mxu0
        %v988 = vadd.f32 0.0, %v987
        %v989 = vpop.f32.mrb[0].mxu0
        %v990 = vpop.f32.mrb[0].mxu0
        %v991 = vpop.f32.mrb[0].mxu0
        %992 = vdwg.mxu0
        %v993 = vpack.c.bf16 %v988, %v988
        %v995 = vunpack.c.l.b16 %v993
        %v996 = vpack.c.b16 %v995, %v995
        %997 = vrot.lane.b32.xlu0 %v996, 24
        %v998 = vpop.permute.xlu0 %997
        %vm1000 = vcmask 257216
        %1001 = vst.msk [vmem:[#allocation3] sm:$0xf] %vm1000, %v998
        %v1002 = vld [vmem:[#allocation3] sm:$0xf]
        %v1003 = vld [vmem:[#allocation9] sm:$0xf]
        %v1004 = vld [vmem:[#allocation9 + $0x4] sm:$0xf]
        %v1005 = vld [vmem:[#allocation9 + $0x8] sm:$0xf]
        %v1006 = vld [vmem:[#allocation9 + $0xc] sm:$0xf]
        %v1007 = vld [vmem:[%s4] sm:$0x1]
        %v1009 = vlaneseq
        %v1010 = vshrl.u32 %v1009, 7
        %v1011 = vsub.s32 0, %v1010
        %v1012 = vrot.slane %v1007, %v1011
        %v1018 = vunpack.c.l.b16 %v1003
        %v1019 = vunpack.c.l.b16 %v1004
        %v1020 = vunpack.c.l.b16 %v1005
        %v1021 = vunpack.c.l.b16 %v1006
        %v1022 = vpack.c.b16 %v1019, %v1018
        %v1023 = vpack.c.b16 %v1021, %v1020
        %v1027 = vsel %vm472, %v1002, 0
        %1029 = vmatprep.subr.bf16.mxu0 0
        %1030 = vmatpush1.bf16.msra.mxu0 %v1022
        %1031 = vmatprep.subr.bf16.mxu0 0
        %1032 = vmatpush1.bf16.msra.mxu0 %v1023
        %1033 = vmatprep.subr.bf16.mxu0 0
        %1034 = vmatpush1.bf16.msra.mxu0 0
        %1035 = vmatprep.subr.bf16.mxu0 0
        %1036 = vmatpush1.bf16.msra.mxu0 0
        %1037 = vmatprep.subr.bf16.mxu0 0
        %1038 = vmatpush1.bf16.msra.mxu0 0
        %1039 = vmatprep.subr.bf16.mxu0 0
        %1040 = vmatpush1.bf16.msra.mxu0 0
        %1041 = vmatprep.subr.bf16.mxu0 0
        %1042 = vmatpush1.bf16.msra.mxu0 0
        %1043 = vmatprep.subr.bf16.mxu0 0
        %1044 = vmatpush1.bf16.msra.mxu0 0
        %1045 = vmatprep.subr.bf16.mxu0 0
        %1046 = vmatpush1.bf16.msra.mxu0 0
        %1047 = vmatprep.subr.bf16.mxu0 0
        %1048 = vmatpush1.bf16.msra.mxu0 0
        %1049 = vmatprep.subr.bf16.mxu0 0
        %1050 = vmatpush1.bf16.msra.mxu0 0
        %1051 = vmatprep.subr.bf16.mxu0 0
        %1052 = vmatpush1.bf16.msra.mxu0 0
        %1053 = vmatprep.subr.bf16.mxu0 0
        %1054 = vmatpush1.bf16.msra.mxu0 0
        %1055 = vmatprep.subr.bf16.mxu0 0
        %1056 = vmatpush1.bf16.msra.mxu0 0
        %1057 = vmatprep.subr.bf16.mxu0 0
        %1058 = vmatpush1.bf16.msra.mxu0 0
        %1059 = vmatprep.subr.bf16.mxu0 0
        %1060 = vmatpush1.bf16.msra.mxu0 0
        %1061 = vmatprep.mubr.bf16.mxu0 0
        %1062 = vmatmul.mubr.bf16.gmra.mrb[0].mxu0 %v1027
        %v1063 = vpop.f32.mrb[0].mxu0
        %v1064 = vadd.f32 %v1012, %v1063
        %v1065 = vpop.f32.mrb[0].mxu0
        %v1066 = vpop.f32.mrb[0].mxu0
        %v1067 = vpop.f32.mrb[0].mxu0
        %1068 = vdwg.mxu0
        %1069 = vst.msk [vmem:[%s282] sm:$0xff] %vm472, %v1064
        %s1070 = sand.u32 %s155, 1
        %s1071 = scalar_lea.sflag [#allocation6], %s1070
        %s1072 = sand.u32 %s155, 1
        %s1073 = smul.addr %s1072, 8
        %s1074 = scalar_lea.vmem [#allocation10], %s1073
        // Predicated region
        $region57: #{tpu_custom_call.1} parent=39 // pred_check
          %p1075 = pneg %p165
        $region58: #{tpu_custom_call.1} parent=39 // pred_check_branch
          %1077 = sbr.rel (%p1075) target = $region60
        $region59: #{tpu_custom_call.1} parent=39 // pred_region
          %s1079 = ssub.s32 128, 128
          %1080 = vsyncadd %s1071, %s1079
          %s1081 = sadd.s32 %s28, %s27
          %s1082 = smul.addr %s1081, 128
          %s1083 = scalar_lea.hbm %s5, %s1082
          %s1085 = sshll.u32 %s1074, 4
          %s1086 = int_to_ptr.vmem [resolvable:$true] %s1085
          %1088 = dma.vmem_to_hbm [thread:$0]  %s1086, 128, %s1083, %s1071
        $region60: #{tpu_custom_call.1} parent=39 // pred_fallthru
          _
      $region40: #{tpu_custom_call.1} parent=5 // pred_fallthru
        _
      %p1089 = scmp.le.s32.totalorder 2, %s18
      // Predicated region
      $region61: #{tpu_custom_call.1} parent=5 // pred_check
        %p1090 = pneg %p1089
      $region62: #{tpu_custom_call.1} parent=5 // pred_check_branch
        %1092 = sbr.rel (%p1090) target = $region64
      $region63: #{tpu_custom_call.1} parent=5 // pred_region
        %s1093 = ssub.s32 %s18, 2
        // Predicated region
        $region65: #{tpu_custom_call.1} parent=63 // pred_check
          %p1094 = pneg %p171
        $region66: #{tpu_custom_call.1} parent=63 // pred_check_branch
          %1096 = sbr.rel (%p1094) target = $region68
        $region67: #{tpu_custom_call.1} parent=63 // pred_region
          %s1097 = sand.u32 %s156, 1
          %s1098 = scalar_lea.sflag [#allocation6], %s1097
          %s1099 = sand.u32 %s156, 1
          %s1100 = smul.addr %s1099, 8
          %s1101 = scalar_lea.vmem [#allocation10], %s1100
          %1102 = dma.done %s1098, 128
        $region68: #{tpu_custom_call.1} parent=63 // pred_fallthru
          _
      $region64: #{tpu_custom_call.1} parent=5 // pred_fallthru
        _
    $region6: #{tpu_custom_call.1} parent=1 // loop_footer
      %s22 = sadd.s32 1, %s18
    $region7: #{tpu_custom_call.1} parent=1 // loop_footer_branch
      %17 = sbr.rel target = $region3
    $region8: #{tpu_custom_call.1} parent=1 // loop_exit
      _
    %1103 = vsyncpa [#allocation5], 1
    %s1104 = scalar_lea.sflag [#allocation5], 1
    %1105 = vsyncpa %s1104, 1
    %1106 = vsyncpa [#allocation8], 1
    %1107 = vsyncpa [#allocation6], 1
    %s1108 = scalar_lea.sflag [#allocation6], 1
    %1109 = vsyncpa %s1108, 1

</llo_original>
